<compile_context>
chip_gen: v7x
topology: tpu7x:2x2x1
jax: 0.10.0
libtpu: 0.0.40
codegen_flags: <defaults>
</compile_context>

<pallas_src>
import functools

import jax
import jax.numpy as jnp
from jax import lax
from jax.experimental import pallas as pl
from jax.experimental.pallas import tpu as pltpu


# ----------------------------------------------------------------------------
# Fast path: whole image(s) per grid step (fits comfortably in VMEM).
# ----------------------------------------------------------------------------
def _iln_block_kernel(x_ref, params_ref, o_ref, *, eps, c, hw):
    # x_ref: (TB, C, HW) block; params_ref: (3, C, 1) = [rho, gamma, beta].
    x = x_ref[...].astype(jnp.float32)                        # (TB, C, HW)

    # ---- single pass over the tile: raw moments per channel ----
    s1 = jnp.sum(x, axis=2, keepdims=True)                    # (TB, C, 1)
    s2 = jnp.sum(x * x, axis=2, keepdims=True)                # (TB, C, 1)

    n_in = float(hw)
    in_mean = s1 / n_in                                       # (TB, C, 1)
    in_var = (s2 - n_in * in_mean * in_mean) / (n_in - 1.0)   # unbiased

    n_ln = float(c * hw)
    ln_mean = jnp.sum(s1, axis=1, keepdims=True) / n_ln       # (TB, 1, 1)
    ln_var = (jnp.sum(s2, axis=1, keepdims=True)
              - n_ln * ln_mean * ln_mean) / (n_ln - 1.0)

    rinv_in = lax.rsqrt(in_var + eps)                         # EUP
    rinv_ln = lax.rsqrt(ln_var + eps)

    rho = params_ref[0].astype(jnp.float32)                   # (C, 1)
    gamma = params_ref[1].astype(jnp.float32)
    beta = params_ref[2].astype(jnp.float32)

    # ---- fold IN/LN mix + affine into one per-channel scale/shift ----
    mix_inv = rho * rinv_in + (1.0 - rho) * rinv_ln           # (TB, C, 1)
    mix_mean = rho * in_mean * rinv_in + (1.0 - rho) * ln_mean * rinv_ln
    scale = gamma * mix_inv
    shift = beta - gamma * mix_mean

    # ---- second (and last) pass over the tile: one FMA per element ----
    o_ref[...] = (x * scale + shift).astype(o_ref.dtype)


# ----------------------------------------------------------------------------
# HW-tiled path for large C*HW: two phases over the same HW tiles.
#   phase 0: accumulate s1/s2 into resident scratch; finalize scale/shift.
#   phase 1: out = x * scale + shift.
# ----------------------------------------------------------------------------
def _iln_hw_tiled_kernel(x_ref, params_ref, o_ref,
                         s1_ref, s2_ref, scale_ref, shift_ref,
                         *, eps, c, hw_total):
    phase = pl.program_id(1)
    hw_i = pl.program_id(2)
    n_hw = pl.num_programs(2)

    @pl.when(jnp.logical_and(phase == 0, hw_i == 0))
    def _():
        s1_ref[...] = jnp.zeros_like(s1_ref)
        s2_ref[...] = jnp.zeros_like(s2_ref)

    @pl.when(phase == 0)
    def _():
        x = x_ref[...].astype(jnp.float32)                    # (1, C, tile_hw)
        s1_ref[...] += jnp.sum(x, axis=2, keepdims=True)      # (1, C, 1)
        s2_ref[...] += jnp.sum(x * x, axis=2, keepdims=True)

    @pl.when(jnp.logical_and(phase == 0, hw_i == n_hw - 1))
    def _():
        s1 = s1_ref[...]                                      # (1, C, 1)
        s2 = s2_ref[...]

        n_in = float(hw_total)
        in_mean = s1 / n_in
        in_var = (s2 - n_in * in_mean * in_mean) / (n_in - 1.0)

        n_ln = float(c * hw_total)
        ln_mean = jnp.sum(s1, axis=1, keepdims=True) / n_ln   # (1, 1, 1)
        ln_var = (jnp.sum(s2, axis=1, keepdims=True)
                  - n_ln * ln_mean * ln_mean) / (n_ln - 1.0)

        rinv_in = lax.rsqrt(in_var + eps)
        rinv_ln = lax.rsqrt(ln_var + eps)

        rho = params_ref[0].astype(jnp.float32)               # (C, 1)
        gamma = params_ref[1].astype(jnp.float32)
        beta = params_ref[2].astype(jnp.float32)

        mix_inv = rho * rinv_in + (1.0 - rho) * rinv_ln       # (1, C, 1)
        mix_mean = rho * in_mean * rinv_in + (1.0 - rho) * ln_mean * rinv_ln
        scale_ref[...] = gamma * mix_inv
        shift_ref[...] = beta - gamma * mix_mean

    @pl.when(phase == 1)
    def _():
        x = x_ref[...].astype(jnp.float32)
        o_ref[...] = (x * scale_ref[...] + shift_ref[...]).astype(o_ref.dtype)


def _pick_hw_tile(hw, c, target_bytes=2 * 1024 * 1024):
    """Largest divisor of hw that is a multiple of 128 with C*tile*4 <= target."""
    best = None
    for t in range(128, hw + 1, 128):
        if hw % t == 0 and c * t * 4 <= target_bytes:
            best = t
    return best


def iln_forward(x, rho, gamma, beta, eps=1e-05, *, force_hw_tile=None):
    """x: (B, C, H, W) NCHW.  rho/gamma/beta: (1, C, 1, 1).  Returns (B, C, H, W)."""
    B, C, H, W = x.shape
    HW = H * W

    x_flat = x.reshape(B, C, HW)
    # Stack the three per-channel parameters into a single input (one DMA).
    params = jnp.concatenate(
        [rho.reshape(1, C, 1), gamma.reshape(1, C, 1), beta.reshape(1, C, 1)],
        axis=0,
    )  # (3, C, 1)

    itemsize = jnp.dtype(x.dtype).itemsize
    per_image_f32 = C * HW * 4

    # Path selection: tile over HW when a single f32 image would crowd VMEM.
    tile_hw = None
    if force_hw_tile is not None:
        tile_hw = int(force_hw_tile)
        if HW % tile_hw != 0 or tile_hw % 128 != 0:
            raise ValueError("force_hw_tile must divide H*W and be a multiple of 128")
    elif per_image_f32 > 8 * 1024 * 1024:
        tile_hw = _pick_hw_tile(HW, C)   # may be None -> fall back to block path

    if tile_hw is None:
        # ---------------- whole-image(s) path ----------------
        # Largest batch-block (divisor of B) whose input tile stays ~<=2 MiB.
        target_block_bytes = 2 * 1024 * 1024
        tb = 1
        for cand in range(B, 0, -1):
            if B % cand == 0 and cand * C * HW * itemsize <= target_block_bytes:
                tb = cand
                break

        block_bytes_f32 = tb * C * HW * 4
        vmem_limit = int(min(100 * 1024 * 1024,
                             max(32 * 1024 * 1024, 8 * block_bytes_f32)))

        kernel = functools.partial(_iln_block_kernel, eps=eps, c=C, hw=HW)
        out_flat = pl.pallas_call(
            kernel,
            out_shape=jax.ShapeDtypeStruct((B, C, HW), x.dtype),
            grid_spec=pltpu.PrefetchScalarGridSpec(
                num_scalar_prefetch=0,
                grid=(B // tb,),
                in_specs=[
                    pl.BlockSpec((tb, C, HW), lambda b: (b, 0, 0)),  # x block
                    pl.BlockSpec((3, C, 1), lambda b: (0, 0, 0)),    # [rho,gamma,beta]
                ],
                out_specs=pl.BlockSpec((tb, C, HW), lambda b: (b, 0, 0)),
            ),
            compiler_params=pltpu.CompilerParams(
                dimension_semantics=("parallel",),
                vmem_limit_bytes=vmem_limit,
            ),
        )(x_flat, params)
    else:
        # ---------------- HW-tiled two-phase path ----------------
        n_hw = HW // tile_hw
        block_bytes_f32 = C * tile_hw * 4
        vmem_limit = int(min(100 * 1024 * 1024,
                             max(32 * 1024 * 1024, 8 * block_bytes_f32)))

        kernel = functools.partial(_iln_hw_tiled_kernel, eps=eps, c=C, hw_total=HW)
        out_flat = pl.pallas_call(
            kernel,
            out_shape=jax.ShapeDtypeStruct((B, C, HW), x.dtype),
            grid_spec=pltpu.PrefetchScalarGridSpec(
                num_scalar_prefetch=0,
                grid=(B, 2, n_hw),
                in_specs=[
                    pl.BlockSpec((1, C, tile_hw), lambda b, p, h: (b, 0, h)),
                    pl.BlockSpec((3, C, 1), lambda b, p, h: (0, 0, 0)),
                ],
                out_specs=pl.BlockSpec((1, C, tile_hw), lambda b, p, h: (b, 0, h)),
                scratch_shapes=[
                    pltpu.VMEM((1, C, 1), jnp.float32),  # s1
                    pltpu.VMEM((1, C, 1), jnp.float32),  # s2
                    pltpu.VMEM((1, C, 1), jnp.float32),  # scale
                    pltpu.VMEM((1, C, 1), jnp.float32),  # shift
                ],
            ),
            compiler_params=pltpu.CompilerParams(
                dimension_semantics=("parallel", "arbitrary", "arbitrary"),
                vmem_limit_bytes=vmem_limit,
            ),
        )(x_flat, params)

    return out_flat.reshape(B, C, H, W)


def iln_reference(x, rho, gamma, beta, eps=1e-05):
    """Pure-JAX reference mirroring the PyTorch ILN forward (unbiased var)."""
    in_mean = jnp.mean(x, axis=(2, 3), keepdims=True)
    in_var = jnp.var(x, axis=(2, 3), keepdims=True, ddof=1)
    ln_mean = jnp.mean(x, axis=(1, 2, 3), keepdims=True)
    ln_var = jnp.var(x, axis=(1, 2, 3), keepdims=True, ddof=1)
    in_val = (x - in_mean) / jnp.sqrt(in_var + eps)
    ln_val = (x - ln_mean) / jnp.sqrt(ln_var + eps)
    out = rho * in_val + (1.0 - rho) * ln_val
    return out * gamma + beta


# TODO(synk): the rest of Generator (convs, linears, upsample, tanh, CAM) stays
# as standard XLA ops; only the ILN/AdaILN normalization core is a Pallas kernel.

if __name__ == "__main__":
    key = jax.random.PRNGKey(0)
    B, C, H, W = 2, 4, 16, 16            # HW = 256, a lane-dense multiple of 128

    x = jax.random.normal(key, (B, C, H, W), dtype=jnp.float32)

    # Deterministic, non-trivial parameter values so both IN and LN paths and the
    # affine are exercised (module init is rho=0, gamma=1, beta=0).
    n_features = C
    rho = jnp.full((1, n_features, 1, 1), 0.3, dtype=jnp.float32)
    gamma = jnp.ones((1, n_features, 1, 1), dtype=jnp.float32) \
        + 0.1 * jnp.arange(n_features, dtype=jnp.float32).reshape(1, n_features, 1, 1)
    beta = 0.05 * jnp.arange(n_features, dtype=jnp.float32).reshape(1, n_features, 1, 1)

    ref = iln_reference(x, rho, gamma, beta)

    # Fast (whole-image) path.
    out = iln_forward(x, rho, gamma, beta)
    out = jax.block_until_ready(out)
    assert out.shape == (B, C, H, W)
    assert jnp.allclose(out, ref, atol=1e-4, rtol=1e-4), "block path mismatch"

    # HW-tiled two-phase path (forced at small shapes to validate the large-image
    # code path: HW=256 split into two 128-wide lane-dense tiles).
    out_tiled = iln_forward(x, rho, gamma, beta, force_hw_tile=128)
    out_tiled = jax.block_until_ready(out_tiled)
    assert jnp.allclose(out_tiled, ref, atol=1e-4, rtol=1e-4), "tiled path mismatch"

    print("KERNEL_OK")
</pallas_src>

<mosaic_0001>
module attributes {stable_mosaic.version = 11 : i64} {
  func.func @_iln_block_kernel(%arg0: i32, %arg1: memref<2x4x256xf32, #tpu.memory_space<vmem>>, %arg2: memref<3x4x1xf32, #tpu.memory_space<vmem>>, %arg3: memref<2x4x256xf32, #tpu.memory_space<vmem>>) attributes {dimension_semantics = [#tpu.dimension_semantics<parallel>], iteration_bounds = array<i64: 1>, scalar_prefetch = 0 : i64, scratch_operands = 0 : i64, tpu.core_type = #tpu.core_type<tc>, window_params = [{transform_indices = @transform_0, window_bounds = array<i64: 2, 4, 256>}, {pipeline_mode = #tpu.pipeline_mode<synchronous>, transform_indices = @transform_1, window_bounds = array<i64: 3, 4, 1>}, {transform_indices = @transform_2, window_bounds = array<i64: 2, 4, 256>}]} {
    %c0 = arith.constant 0 : index
    %c0_0 = arith.constant 0 : index
    %c0_1 = arith.constant 0 : index
    %0 = vector.load %arg1[%c0, %c0_0, %c0_1] : memref<2x4x256xf32, #tpu.memory_space<vmem>>, vector<2x4x256xf32>
    %cst = arith.constant dense<0.000000e+00> : vector<2x4xf32>
    %1 = vector.multi_reduction <add>, %0, %cst [2] : vector<2x4x256xf32> to vector<2x4xf32>
    %2 = vector.shape_cast %1 : vector<2x4xf32> to vector<2x4x1xf32>
    %3 = arith.mulf %0, %0 : vector<2x4x256xf32>
    %cst_2 = arith.constant dense<0.000000e+00> : vector<2x4xf32>
    %4 = vector.multi_reduction <add>, %3, %cst_2 [2] : vector<2x4x256xf32> to vector<2x4xf32>
    %5 = vector.shape_cast %4 : vector<2x4xf32> to vector<2x4x1xf32>
    %cst_3 = arith.constant 2.560000e+02 : f32
    %6 = vector.broadcast %cst_3 : f32 to vector<2x4x1xf32>
    %7 = arith.divf %2, %6 : vector<2x4x1xf32>
    %cst_4 = arith.constant 2.560000e+02 : f32
    %8 = vector.broadcast %cst_4 : f32 to vector<2x4x1xf32>
    %9 = arith.mulf %8, %7 : vector<2x4x1xf32>
    %10 = arith.mulf %9, %7 : vector<2x4x1xf32>
    %11 = arith.subf %5, %10 : vector<2x4x1xf32>
    %cst_5 = arith.constant 2.550000e+02 : f32
    %12 = vector.broadcast %cst_5 : f32 to vector<2x4x1xf32>
    %13 = arith.divf %11, %12 : vector<2x4x1xf32>
    %cst_6 = arith.constant dense<0.000000e+00> : vector<2x1xf32>
    %14 = vector.multi_reduction <add>, %2, %cst_6 [1] : vector<2x4x1xf32> to vector<2x1xf32>
    %15 = vector.shape_cast %14 : vector<2x1xf32> to vector<2x1x1xf32>
    %cst_7 = arith.constant 1.024000e+03 : f32
    %16 = vector.broadcast %cst_7 : f32 to vector<2x1x1xf32>
    %17 = arith.divf %15, %16 : vector<2x1x1xf32>
    %cst_8 = arith.constant dense<0.000000e+00> : vector<2x1xf32>
    %18 = vector.multi_reduction <add>, %5, %cst_8 [1] : vector<2x4x1xf32> to vector<2x1xf32>
    %19 = vector.shape_cast %18 : vector<2x1xf32> to vector<2x1x1xf32>
    %cst_9 = arith.constant 1.024000e+03 : f32
    %20 = vector.broadcast %cst_9 : f32 to vector<2x1x1xf32>
    %21 = arith.mulf %20, %17 : vector<2x1x1xf32>
    %22 = arith.mulf %21, %17 : vector<2x1x1xf32>
    %23 = arith.subf %19, %22 : vector<2x1x1xf32>
    %cst_10 = arith.constant 1.023000e+03 : f32
    %24 = vector.broadcast %cst_10 : f32 to vector<2x1x1xf32>
    %25 = arith.divf %23, %24 : vector<2x1x1xf32>
    %cst_11 = arith.constant 9.99999974E-6 : f32
    %26 = vector.broadcast %cst_11 : f32 to vector<2x4x1xf32>
    %27 = arith.addf %13, %26 : vector<2x4x1xf32>
    %28 = math.rsqrt %27 : vector<2x4x1xf32>
    %cst_12 = arith.constant 9.99999974E-6 : f32
    %29 = vector.broadcast %cst_12 : f32 to vector<2x1x1xf32>
    %30 = arith.addf %25, %29 : vector<2x1x1xf32>
    %31 = math.rsqrt %30 : vector<2x1x1xf32>
    %c0_13 = arith.constant 0 : index
    %c0_14 = arith.constant 0 : index
    %c0_15 = arith.constant 0 : index
    %32 = vector.load %arg2[%c0_13, %c0_14, %c0_15] : memref<3x4x1xf32, #tpu.memory_space<vmem>>, vector<1x4x1xf32>
    %33 = vector.shape_cast %32 : vector<1x4x1xf32> to vector<4x1xf32>
    %c1 = arith.constant 1 : index
    %c0_16 = arith.constant 0 : index
    %c0_17 = arith.constant 0 : index
    %34 = vector.load %arg2[%c1, %c0_16, %c0_17] : memref<3x4x1xf32, #tpu.memory_space<vmem>>, vector<1x4x1xf32>
    %35 = vector.shape_cast %34 : vector<1x4x1xf32> to vector<4x1xf32>
    %c2 = arith.constant 2 : index
    %c0_18 = arith.constant 0 : index
    %c0_19 = arith.constant 0 : index
    %36 = vector.load %arg2[%c2, %c0_18, %c0_19] : memref<3x4x1xf32, #tpu.memory_space<vmem>>, vector<1x4x1xf32>
    %37 = vector.shape_cast %36 : vector<1x4x1xf32> to vector<4x1xf32>
    %38 = vector.shape_cast %33 : vector<4x1xf32> to vector<1x4x1xf32>
    %39 = vector.broadcast %38 : vector<1x4x1xf32> to vector<2x4x1xf32>
    %40 = arith.mulf %39, %28 : vector<2x4x1xf32>
    %cst_20 = arith.constant 1.000000e+00 : f32
    %41 = vector.broadcast %cst_20 : f32 to vector<4x1xf32>
    %42 = arith.subf %41, %33 : vector<4x1xf32>
    %43 = vector.shape_cast %42 : vector<4x1xf32> to vector<1x4x1xf32>
    %44 = vector.broadcast %43 : vector<1x4x1xf32> to vector<2x4x1xf32>
    %45 = vector.broadcast %31 : vector<2x1x1xf32> to vector<2x4x1xf32>
    %46 = arith.mulf %44, %45 : vector<2x4x1xf32>
    %47 = arith.addf %40, %46 : vector<2x4x1xf32>
    %48 = vector.shape_cast %33 : vector<4x1xf32> to vector<1x4x1xf32>
    %49 = vector.broadcast %48 : vector<1x4x1xf32> to vector<2x4x1xf32>
    %50 = arith.mulf %49, %7 : vector<2x4x1xf32>
    %51 = arith.mulf %50, %28 : vector<2x4x1xf32>
    %cst_21 = arith.constant 1.000000e+00 : f32
    %52 = vector.broadcast %cst_21 : f32 to vector<4x1xf32>
    %53 = arith.subf %52, %33 : vector<4x1xf32>
    %54 = vector.shape_cast %53 : vector<4x1xf32> to vector<1x4x1xf32>
    %55 = vector.broadcast %54 : vector<1x4x1xf32> to vector<2x4x1xf32>
    %56 = vector.broadcast %17 : vector<2x1x1xf32> to vector<2x4x1xf32>
    %57 = arith.mulf %55, %56 : vector<2x4x1xf32>
    %58 = vector.broadcast %31 : vector<2x1x1xf32> to vector<2x4x1xf32>
    %59 = arith.mulf %57, %58 : vector<2x4x1xf32>
    %60 = arith.addf %51, %59 : vector<2x4x1xf32>
    %61 = vector.shape_cast %35 : vector<4x1xf32> to vector<1x4x1xf32>
    %62 = vector.broadcast %61 : vector<1x4x1xf32> to vector<2x4x1xf32>
    %63 = arith.mulf %62, %47 : vector<2x4x1xf32>
    %64 = vector.shape_cast %35 : vector<4x1xf32> to vector<1x4x1xf32>
    %65 = vector.broadcast %64 : vector<1x4x1xf32> to vector<2x4x1xf32>
    %66 = arith.mulf %65, %60 : vector<2x4x1xf32>
    %67 = vector.shape_cast %37 : vector<4x1xf32> to vector<1x4x1xf32>
    %68 = vector.broadcast %67 : vector<1x4x1xf32> to vector<2x4x1xf32>
    %69 = arith.subf %68, %66 : vector<2x4x1xf32>
    %70 = vector.broadcast %63 : vector<2x4x1xf32> to vector<2x4x256xf32>
    %71 = arith.mulf %0, %70 : vector<2x4x256xf32>
    %72 = vector.broadcast %69 : vector<2x4x1xf32> to vector<2x4x256xf32>
    %73 = arith.addf %71, %72 : vector<2x4x256xf32>
    %c0_22 = arith.constant 0 : index
    %c0_23 = arith.constant 0 : index
    %c0_24 = arith.constant 0 : index
    %74 = vector.load %arg3[%c0_22, %c0_23, %c0_24] : memref<2x4x256xf32, #tpu.memory_space<vmem>>, vector<2x4x256xf32>
    tpu.vector_store %arg3[%c0_22, %c0_23, %c0_24], %73 {strides = array<i32>} : memref<2x4x256xf32, #tpu.memory_space<vmem>>, vector<2x4x256xf32>,
    return
  }
  func.func @transform_0(%arg0: i32) -> (i32, i32, i32) {
    %c0_i32 = arith.constant 0 : i32
    %c0_i32_0 = arith.constant 0 : i32
    %c0_i32_1 = arith.constant 0 : i32
    return %arg0, %c0_i32, %c0_i32_0 : i32, i32, i32
  }
  func.func @transform_1(%arg0: i32) -> (i32, i32, i32) {
    %c0_i32 = arith.constant 0 : i32
    %c0_i32_0 = arith.constant 0 : i32
    %c0_i32_1 = arith.constant 0 : i32
    %c0_i32_2 = arith.constant 0 : i32
    return %c0_i32, %c0_i32_0, %c0_i32_1 : i32, i32, i32
  }
  func.func @transform_2(%arg0: i32) -> (i32, i32, i32) {
    %c0_i32 = arith.constant 0 : i32
    %c0_i32_0 = arith.constant 0 : i32
    %c0_i32_1 = arith.constant 0 : i32
    return %arg0, %c0_i32, %c0_i32_0 : i32, i32, i32
  }
}

</mosaic_0001>

<llo_original>
// kernel: tpu_custom_call.1
$region0: #{tpu_custom_call.1}
  #allocation0 [shape = 'u32[]', space=smem, size = 0x4, offset = 0x4, fixed_abs, tag = 'smem constant byte address 0x4 - core index']
  #allocation1 [shape = 'u32[144,128]{1,0:T(1,128)}', space=vmem, size = 0x12000, scoped, tag = 'internal scratch']
  %s0 = inlined_call_operand.hbm [shape: f32[2,4,256], index: 0, kind: input, shape index: {}]
  %s1 = inlined_call_operand.vmem [shape: f32[3,4,1], index: 1, kind: input, shape index: {}]
  %s2 = inlined_call_operand.hbm [shape: f32[2,4,256], index: 2, kind: output, shape index: {}]
  %s3 = sld [smem:[#allocation0]]
  $region22: #{tpu_custom_call.1} parent=0
    _
  %s5 = ssub.s32 1, %s3
  %s6 = scalar_select 0, %s5, %s3
  $region1: #{tpu_custom_call.1} parent=0
    #allocation2 [shape = 'u8[8192]{0}', space=vmem, size = 0x2000, scoped, tag = 'input window, operand 0, single buffered']
    #allocation3 [shape = 's32[1]{0}', space=sflag, size = 0x4, scoped, tag = 'scoped memory for tpu_custom_call.1']
    #allocation4 [shape = 's32[1]{0}', space=sflag, size = 0x4, scoped, tag = 'scoped memory for tpu_custom_call.1']
    #allocation5 [shape = 'u8[8192]{0}', space=vmem, size = 0x2000, scoped, tag = 'output window, operand 0, single buffered']
    %7 = vsyncpa [#allocation3], 0
    %8 = vsyncpa [#allocation4], 0
    // Predicated region
    $region2: #{tpu_custom_call.1} parent=1 // pred_check
      _
    $region3: #{tpu_custom_call.1} parent=1 // pred_check_branch
      %10 = sbr.rel (0) target = $region5
    $region4: #{tpu_custom_call.1} parent=1 // pred_region
      %s12 = ssub.s32 256, 256
      %13 = vsyncadd [#allocation3], %s12
      %s14 = sshll.u32 [#allocation2], 4
      %s15 = int_to_ptr.vmem [resolvable:$true] %s14
      %20 = dma.hbm_to_vmem [thread:$0]  %s0, 256, %s15, [#allocation3], 128, 128, 8
    $region5: #{tpu_custom_call.1} parent=1 // pred_fallthru
      _
    // Predicated region
    $region6: #{tpu_custom_call.1} parent=1 // pred_check
      _
    $region7: #{tpu_custom_call.1} parent=1 // pred_check_branch
      %22 = sbr.rel (0) target = $region9
    $region8: #{tpu_custom_call.1} parent=1 // pred_region
      _
    $region9: #{tpu_custom_call.1} parent=1 // pred_fallthru
      _
    // Predicated region
    $region10: #{tpu_custom_call.1} parent=1 // pred_check
      _
    $region11: #{tpu_custom_call.1} parent=1 // pred_check_branch
      %24 = sbr.rel (0) target = $region13
    $region12: #{tpu_custom_call.1} parent=1 // pred_region
      %25 = dma.done [#allocation3], 256
    $region13: #{tpu_custom_call.1} parent=1 // pred_fallthru
      _
    %v26 = vld [vmem:[#allocation2] sm:$0xff]
    %v27 = vld [vmem:[#allocation2 + $0x8] sm:$0xff]
    %v30 = vcombine.high %v26, %v26
    %v31 = vcombine.high %v27, %v27
    %vm34 = vcmask 1043456
    %v35 = vsel %vm34, %v26, 0.0
    %v36 = vsel %vm34, %v30, 0.0
    %v37 = vadd.f32 %v35, %v36
    %38 = vadd.xlane.f32.xlu0 %v37
    %v39 = vpop.xlane.xlu0 %38
    %v40 = vsel %vm34, %v27, 0.0
    %v41 = vsel %vm34, %v31, 0.0
    %v42 = vadd.f32 %v40, %v41
    %43 = vadd.xlane.f32.xlu0 %v42
    %v44 = vpop.xlane.xlu0 %43
    %v45 = vmul.f32 %v26, %v26
    %v46 = vmul.f32 %v27, %v27
    %v49 = vcombine.high %v45, %v45
    %v50 = vcombine.high %v46, %v46
    %v53 = vsel %vm34, %v45, 0.0
    %v54 = vsel %vm34, %v49, 0.0
    %v55 = vadd.f32 %v53, %v54
    %56 = vadd.xlane.f32.xlu0 %v55
    %v57 = vpop.xlane.xlu0 %56
    %v58 = vsel %vm34, %v46, 0.0
    %v59 = vsel %vm34, %v50, 0.0
    %v60 = vadd.f32 %v58, %v59
    %61 = vadd.xlane.f32.xlu0 %v60
    %v62 = vpop.xlane.xlu0 %61
    %v63 = vrcp.pop 256.0
    %v64 = vmul.f32 %v39, %v63
    %v65 = vmul.f32 %v44, %v63
    %v66 = vmul.f32 %v64, 256.0
    %v67 = vmul.f32 %v65, 256.0
    %v68 = vmul.f32 %v66, %v64
    %v69 = vmul.f32 %v67, %v65
    %v70 = vsub.f32 %v57, %v68
    %v71 = vsub.f32 %v62, %v69
    %v72 = vrcp.pop 255.0
    %v73 = vmul.f32 %v70, %v72
    %v74 = vmul.f32 %v71, %v72
    %v75 = vsel %vm34, %v39, 0.0
    %v76 = vrot.slane %v75, 4
    %v77 = vadd.f32 %v75, %v76
    %v78 = vrot.slane %v77, 2
    %v79 = vadd.f32 %v77, %v78
    %v80 = vrot.slane %v79, 1
    %v81 = vadd.f32 %v79, %v80
    %v82 = vsel %vm34, %v44, 0.0
    %v83 = vrot.slane %v82, 4
    %v84 = vadd.f32 %v82, %v83
    %v85 = vrot.slane %v84, 2
    %v86 = vadd.f32 %v84, %v85
    %v87 = vrot.slane %v86, 1
    %v88 = vadd.f32 %v86, %v87
    %v89 = vrcp.pop 1024.0
    %v90 = vmul.f32 %v81, %v89
    %v91 = vmul.f32 %v88, %v89
    %v92 = vsel %vm34, %v57, 0.0
    %v93 = vrot.slane %v92, 4
    %v94 = vadd.f32 %v92, %v93
    %v95 = vrot.slane %v94, 2
    %v96 = vadd.f32 %v94, %v95
    %v97 = vrot.slane %v96, 1
    %v98 = vadd.f32 %v96, %v97
    %v99 = vsel %vm34, %v62, 0.0
    %v100 = vrot.slane %v99, 4
    %v101 = vadd.f32 %v99, %v100
    %v102 = vrot.slane %v101, 2
    %v103 = vadd.f32 %v101, %v102
    %v104 = vrot.slane %v103, 1
    %v105 = vadd.f32 %v103, %v104
    %v106 = vmul.f32 %v90, 1024.0
    %v107 = vmul.f32 %v91, 1024.0
    %v108 = vmul.f32 %v106, %v90
    %v109 = vmul.f32 %v107, %v91
    %v110 = vsub.f32 %v98, %v108
    %v111 = vsub.f32 %v105, %v109
    %v112 = vrcp.pop 1023.0
    %v113 = vmul.f32 %v110, %v112
    %v114 = vmul.f32 %v111, %v112
    %v115 = vadd.f32 %v73, 1e-05
    %v116 = vadd.f32 %v74, 1e-05
    %v117 = vrsqrt.pop %v115
    %v118 = vrsqrt.pop %v116
    %v119 = vadd.f32 %v113, 1e-05
    %v120 = vadd.f32 %v114, 1e-05
    %v121 = vrsqrt.pop %v119
    %v122 = vrsqrt.pop %v120
    %v123 = vld [vmem:[%s1] sm:$0xf]
    %s124 = scalar_lea.vmem %s1, 4
    %v125 = vld [vmem:[%s124] sm:$0xf]
    %s126 = scalar_lea.vmem %s1, 8
    %v127 = vld [vmem:[%s126] sm:$0xf]
    %v128 = vmul.f32 %v123, %v117
    %v129 = vmul.f32 %v123, %v118
    %v130 = vsub.f32 1.0, %v123
    %v131 = vmul.f32 %v130, %v121
    %v132 = vmul.f32 %v130, %v122
    %v133 = vadd.f32 %v128, %v131
    %v134 = vadd.f32 %v129, %v132
    %v135 = vmul.f32 %v123, %v64
    %v136 = vmul.f32 %v123, %v65
    %v137 = vmul.f32 %v135, %v117
    %v138 = vmul.f32 %v136, %v118
    %v139 = vmul.f32 %v130, %v90
    %v140 = vmul.f32 %v130, %v91
    %v141 = vmul.f32 %v139, %v121
    %v142 = vmul.f32 %v140, %v122
    %v143 = vadd.f32 %v137, %v141
    %v144 = vadd.f32 %v138, %v142
    %v145 = vmul.f32 %v125, %v133
    %v146 = vmul.f32 %v125, %v134
    %v147 = vmul.f32 %v125, %v143
    %v148 = vmul.f32 %v125, %v144
    %v149 = vsub.f32 %v127, %v147
    %v150 = vsub.f32 %v127, %v148
    %152 = vset.pattern.permute.xlu0 0
    %153 = vperm.xlu0 %152, %v145
    %v154 = vpop.permute.xlu0 %153
    %156 = vset.pattern.permute.xlu0 0
    %157 = vperm.xlu0 %156, %v146
    %v158 = vpop.permute.xlu0 %157
    %v160 = vunpack.c.l.s4 839922192
    %v161 = vunpack.c.0.s8 %v160
    %v162 = vlaneseq
    %v163 = vshrl.u32 %v162, 7
    %v164 = vsub.s32 %v161, %v163
    %v165 = vrot.slane %v154, %v164
    %v167 = vunpack.c.l.s4 839922192
    %v168 = vunpack.c.0.s8 %v167
    %v169 = vlaneseq
    %v170 = vshrl.u32 %v169, 7
    %v171 = vsub.s32 %v168, %v170
    %v172 = vrot.slane %v158, %v171
    %v175 = vmul.f32 %v26, %v165
    %v176 = vmul.f32 %v27, %v172
    %178 = vset.pattern.permute.xlu0 0
    %179 = vperm.xlu0 %178, %v149
    %v180 = vpop.permute.xlu0 %179
    %182 = vset.pattern.permute.xlu0 0
    %183 = vperm.xlu0 %182, %v150
    %v184 = vpop.permute.xlu0 %183
    %v186 = vunpack.c.l.s4 839922192
    %v187 = vunpack.c.0.s8 %v186
    %v188 = vlaneseq
    %v189 = vshrl.u32 %v188, 7
    %v190 = vsub.s32 %v187, %v189
    %v191 = vrot.slane %v180, %v190
    %v193 = vunpack.c.l.s4 839922192
    %v194 = vunpack.c.0.s8 %v193
    %v195 = vlaneseq
    %v196 = vshrl.u32 %v195, 7
    %v197 = vsub.s32 %v194, %v196
    %v198 = vrot.slane %v184, %v197
    %v201 = vadd.f32 %v175, %v191
    %v202 = vadd.f32 %v176, %v198
    %203 = vst [vmem:[#allocation5] sm:$0xff] %v201
    %204 = vst [vmem:[#allocation5 + $0x8] sm:$0xff] %v202
    // Predicated region
    $region14: #{tpu_custom_call.1} parent=1 // pred_check
      _
    $region15: #{tpu_custom_call.1} parent=1 // pred_check_branch
      %206 = sbr.rel (0) target = $region17
    $region16: #{tpu_custom_call.1} parent=1 // pred_region
      %s208 = ssub.s32 256, 256
      %209 = vsyncadd [#allocation4], %s208
      %s210 = sshll.u32 [#allocation5], 4
      %s211 = int_to_ptr.vmem [resolvable:$true] %s210
      %216 = dma.vmem_to_hbm [thread:$0]  %s211, 256, %s2, [#allocation4], 128, 128, 8
    $region17: #{tpu_custom_call.1} parent=1 // pred_fallthru
      _
    // Predicated region
    $region18: #{tpu_custom_call.1} parent=1 // pred_check
      _
    $region19: #{tpu_custom_call.1} parent=1 // pred_check_branch
      %218 = sbr.rel (0) target = $region21
    $region20: #{tpu_custom_call.1} parent=1 // pred_region
      %219 = dma.done [#allocation4], 256
    $region21: #{tpu_custom_call.1} parent=1 // pred_fallthru
      _
    %220 = vsyncpa [#allocation3], 1
    %221 = vsyncpa [#allocation4], 1

</llo_original>
